<compile_context>
chip_gen: v7x
topology: tpu7x:2x2x1
jax: 0.10.0
libtpu: 0.0.40
codegen_flags: <defaults>
</compile_context>

<pallas_src>
import jax
import jax.numpy as jnp
from jax.experimental import pallas as pl
from jax.experimental.pallas import tpu as pltpu

_LANE = 128
_MEGACORE_MIN_BYTES = 1 << 20      # only force >=2 grid tiles for arrays >= 1 MiB


def _scale_kernel(g_ref, x_ref, o_ref):
    # g_ref is (TR, 1) (layout A) or (1, TL) (layout B/C); broadcasts against x.
    o_ref[...] = (x_ref[...] * g_ref[...]).astype(o_ref.dtype)


def _largest_aligned_divisor(dim: int, align: int, cap: int) -> int:
    """Largest t with t % align == 0, dim % t == 0 and t <= cap.

    Requires dim % align == 0.  Returns the full dim when it fits under `cap`,
    otherwise falls back to at least `align`.
    """
    cap = max(cap, align)
    if dim <= cap:
        return dim
    best = align
    t = 2 * align
    while t <= cap:
        if dim % t == 0:
            best = t
        t += align
    return best


def _vmem_budget():
    """(per-block byte budget, vmem_limit_bytes), generation-aware.

    v5e/v6e have 128 MiB VMEM per core -> 12 MiB blocks under a 96 MiB limit.
    v7x has only 64 MiB -> 8 MiB blocks under a 48 MiB limit; that pair is also
    the safe fallback when the hardware query is unavailable.
    """
    try:
        cap = pltpu.get_tpu_info().vmem_capacity_bytes
    except Exception:
        cap = None
    if cap is not None and cap >= 100 * 1024 * 1024:
        return 12 * 1024 * 1024, 96 * 1024 * 1024
    return 8 * 1024 * 1024, 48 * 1024 * 1024


def layer_scaler(x: jax.Array, gamma: jax.Array, *, donate_x: bool = False,
                 block_bytes: int | None = None) -> jax.Array:
    """x: (N, C, H, W), gamma: (C,). Returns gamma[None, :, None, None] * x."""
    N, C, H, W = x.shape
    HW = H * W
    out_dtype = jnp.promote_types(x.dtype, gamma.dtype)   # match torch promotion
    x_item = jnp.dtype(x.dtype).itemsize
    o_item = jnp.dtype(out_dtype).itemsize
    pack = max(8, 32 // min(x_item, o_item))   # sublane alignment: 8 f32 / 16 bf16 / ...
    gamma = gamma.astype(out_dtype)

    default_block, vmem_limit = _vmem_budget()
    if block_bytes is None:
        block_bytes = default_block

    pad = 0
    if HW % _LANE == 0:
        # Layout A: rows = N*C, lanes = HW (already lane-dense), gamma (rows, 1).
        rows, lanes = N * C, HW
        x2 = x.reshape(rows, lanes)
        g2 = jnp.tile(gamma, N).reshape(rows, 1)        # gamma[r % C] per row
        g_index = lambda i, j: (i, 0)
        g_row_vector = False
    else:
        # Layout B/C: rows = N, lanes = C*HW, gamma pre-broadcast to (1, lanes).
        # Pad the lane axis to a multiple of 128 when needed so every store is
        # a full unmasked lane-dense vst.
        rows, lanes = N, C * HW
        pad = (-lanes) % _LANE
        x2 = x.reshape(rows, lanes)
        g1 = jnp.repeat(gamma, HW)                      # gamma[c] at lane c*HW + s
        if pad:
            x2 = jnp.pad(x2, ((0, 0), (0, pad)))
            g1 = jnp.pad(g1, (0, pad))
            lanes += pad
        g2 = g1.reshape(1, lanes)
        g_index = lambda i, j: (0, j)
        g_row_vector = True

    # ---- tile selection: biggest blocks under the budget, full rows preferred.
    budget_elems = max(1, block_bytes // o_item)
    tr_min = pack if rows % pack == 0 else rows
    if tr_min * lanes <= budget_elems:
        tl = lanes                                      # one contiguous DMA per block
    else:
        tl = _largest_aligned_divisor(lanes, _LANE, budget_elems // max(tr_min, 1))
    if rows % pack == 0:
        tr = _largest_aligned_divisor(rows, pack, max(pack, budget_elems // tl))
    else:
        tr = rows                                       # "block == full dim" exemption

    # Keep >= 2 tiles on a parallel axis so v7x's two TensorCores both get work.
    if rows == tr and lanes == tl and rows * lanes * o_item >= _MEGACORE_MIN_BYTES:
        if (lanes // 2) % _LANE == 0:
            tl = lanes // 2
        elif rows % (2 * pack) == 0:
            tr = rows // 2

    grid = (rows // tr, lanes // tl)
    n_steps = grid[0] * grid[1]

    # 3-deep buffering on x hides DMA latency jitter (mainly helps v5e).
    x_spec_kwargs = {}
    n_x_bufs = 2
    if n_steps >= 3:
        x_spec_kwargs["pipeline_mode"] = pl.Buffered(3)
        n_x_bufs = 3

    g_block = (1, tl) if g_row_vector else (tr, 1)
    g_block_bytes = (tl if g_row_vector else tr) * o_item

    # Explicit VMEM accounting: x (2-3 bufs) + out (2 bufs) + gamma (2 bufs) + slack.
    needed = (n_x_bufs * tr * tl * x_item + 2 * tr * tl * o_item
              + 2 * g_block_bytes + (2 << 20))
    vmem_limit = max(vmem_limit, needed)

    io_alias = {}
    if donate_x and out_dtype == x.dtype:
        io_alias = {1: 0}   # alias x2 -> out; only a win when the caller donates x

    out = pl.pallas_call(
        _scale_kernel,
        out_shape=jax.ShapeDtypeStruct((rows, lanes), out_dtype),
        grid_spec=pltpu.PrefetchScalarGridSpec(
            num_scalar_prefetch=0,
            grid=grid,
            in_specs=[
                pl.BlockSpec(g_block, g_index),
                pl.BlockSpec((tr, tl), lambda i, j: (i, j), **x_spec_kwargs),
            ],
            out_specs=pl.BlockSpec((tr, tl), lambda i, j: (i, j)),
        ),
        compiler_params=pltpu.CompilerParams(
            dimension_semantics=("parallel", "parallel"),
            vmem_limit_bytes=int(vmem_limit),
        ),
        input_output_aliases=io_alias,
    )(g2, x2)

    if pad:
        out = out[:, : C * HW]
    return out.reshape(N, C, H, W)


if __name__ == "__main__":
    key = jax.random.PRNGKey(0)
    k1, k2, k3, k4, k5 = jax.random.split(key, 5)

    # 1) Module-consistent small shape (layout A: HW % 128 == 0).
    N, C, H, W = 2, 4, 16, 16
    init_value = 0.5
    x = jax.random.normal(k1, (N, C, H, W), dtype=jnp.float32)
    gamma = init_value * jnp.ones((C,), dtype=jnp.float32)
    out = jax.block_until_ready(layer_scaler(x, gamma))
    ref = gamma[None, :, None, None] * x
    assert out.shape == (N, C, H, W)
    assert out.dtype == ref.dtype
    assert jnp.allclose(out, ref, atol=1e-6, rtol=1e-6)

    # 2) Layout B: 7x7 spatial, C*HW multiple of 128 (lane-flattened path).
    x2 = jax.random.normal(k2, (2, 128, 7, 7), dtype=jnp.float32)
    g2 = jax.random.normal(k3, (128,), dtype=jnp.float32)
    out2 = jax.block_until_ready(layer_scaler(x2, g2))
    ref2 = g2[None, :, None, None] * x2
    assert jnp.allclose(out2, ref2, atol=1e-6, rtol=1e-6)

    # 3) Layout C: neither HW nor C*HW 128-aligned -> padded lane axis.
    x3 = jax.random.normal(k4, (2, 5, 7, 7), dtype=jnp.float32)
    g3 = jax.random.normal(k5, (5,), dtype=jnp.float32)
    out3 = jax.block_until_ready(layer_scaler(x3, g3))
    ref3 = g3[None, :, None, None] * x3
    assert jnp.allclose(out3, ref3, atol=1e-6, rtol=1e-6)

    # 4) Multi-step grid (exercises the pipeline + Buffered(3) path) via a
    #    small per-block budget override on a modest shape.
    x4 = jax.random.normal(k1, (2, 64, 16, 16), dtype=jnp.float32)
    g4 = jax.random.normal(k2, (64,), dtype=jnp.float32)
    out4 = jax.block_until_ready(layer_scaler(x4, g4, block_bytes=16 * 1024))
    ref4 = g4[None, :, None, None] * x4
    assert jnp.allclose(out4, ref4, atol=1e-6, rtol=1e-6)

    print("KERNEL_OK")
</pallas_src>

<mosaic_0001>
module attributes {stable_mosaic.version = 11 : i64} {
  func.func @_scale_kernel(%arg0: i32, %arg1: i32, %arg2: memref<8x1xf32, #tpu.memory_space<vmem>>, %arg3: memref<8x256xf32, #tpu.memory_space<vmem>>, %arg4: memref<8x256xf32, #tpu.memory_space<vmem>>) attributes {dimension_semantics = [#tpu.dimension_semantics<parallel>, #tpu.dimension_semantics<parallel>], iteration_bounds = array<i64: 1, 1>, scalar_prefetch = 0 : i64, scratch_operands = 0 : i64, tpu.core_type = #tpu.core_type<tc>, window_params = [{transform_indices = @transform_0, window_bounds = array<i64: 8, 1>}, {transform_indices = @transform_1, window_bounds = array<i64: 8, 256>}, {transform_indices = @transform_2, window_bounds = array<i64: 8, 256>}]} {
    %c0 = arith.constant 0 : index
    %c0_0 = arith.constant 0 : index
    %0 = vector.load %arg3[%c0, %c0_0] : memref<8x256xf32, #tpu.memory_space<vmem>>, vector<8x256xf32>
    %c0_1 = arith.constant 0 : index
    %c0_2 = arith.constant 0 : index
    %1 = vector.load %arg2[%c0_1, %c0_2] : memref<8x1xf32, #tpu.memory_space<vmem>>, vector<8x1xf32>
    %2 = vector.broadcast %1 : vector<8x1xf32> to vector<8x256xf32>
    %3 = arith.mulf %0, %2 : vector<8x256xf32>
    %c0_3 = arith.constant 0 : index
    %c0_4 = arith.constant 0 : index
    %4 = vector.load %arg4[%c0_3, %c0_4] : memref<8x256xf32, #tpu.memory_space<vmem>>, vector<8x256xf32>
    tpu.vector_store %arg4[%c0_3, %c0_4], %3 {strides = array<i32>} : memref<8x256xf32, #tpu.memory_space<vmem>>, vector<8x256xf32>,
    return
  }
  func.func @transform_0(%arg0: i32, %arg1: i32) -> (i32, i32) {
    %c0_i32 = arith.constant 0 : i32
    %c0_i32_0 = arith.constant 0 : i32
    return %arg0, %c0_i32 : i32, i32
  }
  func.func @transform_1(%arg0: i32, %arg1: i32) -> (i32, i32) {
    %c0_i32 = arith.constant 0 : i32
    return %arg0, %arg1 : i32, i32
  }
  func.func @transform_2(%arg0: i32, %arg1: i32) -> (i32, i32) {
    %c0_i32 = arith.constant 0 : i32
    return %arg0, %arg1 : i32, i32
  }
}

</mosaic_0001>

<llo_original>
// kernel: tpu_custom_call.1
$region0: #{tpu_custom_call.1}
  #allocation0 [shape = 'u32[]', space=smem, size = 0x4, offset = 0x4, fixed_abs, tag = 'smem constant byte address 0x4 - core index']
  #allocation1 [shape = 'u32[144,128]{1,0:T(1,128)}', space=vmem, size = 0x12000, scoped, tag = 'internal scratch']
  %s0 = inlined_call_operand.vmem [shape: f32[8,1], index: 0, kind: input, shape index: {}]
  %s1 = inlined_call_operand.hbm [shape: f32[8,256], index: 1, kind: input, shape index: {}]
  %s2 = inlined_call_operand.hbm [shape: f32[8,256], index: 2, kind: output, shape index: {}]
  %s3 = sld [smem:[#allocation0]]
  $region22: #{tpu_custom_call.1} parent=0
    _
  %s5 = ssub.s32 1, %s3
  %s6 = scalar_select 0, %s5, %s3
  $region1: #{tpu_custom_call.1} parent=0
    #allocation2 [shape = 'u8[8192]{0}', space=vmem, size = 0x2000, scoped, tag = 'input window, operand 1, single buffered']
    #allocation3 [shape = 's32[1]{0}', space=sflag, size = 0x4, scoped, tag = 'scoped memory for tpu_custom_call.1']
    #allocation4 [shape = 's32[1]{0}', space=sflag, size = 0x4, scoped, tag = 'scoped memory for tpu_custom_call.1']
    #allocation5 [shape = 'u8[8192]{0}', space=vmem, size = 0x2000, scoped, tag = 'output window, operand 0, single buffered']
    %7 = vsyncpa [#allocation3], 0
    %8 = vsyncpa [#allocation4], 0
    // Predicated region
    $region2: #{tpu_custom_call.1} parent=1 // pred_check
      _
    $region3: #{tpu_custom_call.1} parent=1 // pred_check_branch
      %10 = sbr.rel (0) target = $region5
    $region4: #{tpu_custom_call.1} parent=1 // pred_region
      _
    $region5: #{tpu_custom_call.1} parent=1 // pred_fallthru
      _
    // Predicated region
    $region6: #{tpu_custom_call.1} parent=1 // pred_check
      _
    $region7: #{tpu_custom_call.1} parent=1 // pred_check_branch
      %12 = sbr.rel (0) target = $region9
    $region8: #{tpu_custom_call.1} parent=1 // pred_region
      %s14 = ssub.s32 256, 256
      %15 = vsyncadd [#allocation3], %s14
      %s17 = sshll.u32 [#allocation2], 4
      %s18 = int_to_ptr.vmem [resolvable:$true] %s17
      %20 = dma.hbm_to_vmem [thread:$0]  %s1, 256, %s18, [#allocation3]
    $region9: #{tpu_custom_call.1} parent=1 // pred_fallthru
      _
    // Predicated region
    $region10: #{tpu_custom_call.1} parent=1 // pred_check
      _
    $region11: #{tpu_custom_call.1} parent=1 // pred_check_branch
      %22 = sbr.rel (0) target = $region13
    $region12: #{tpu_custom_call.1} parent=1 // pred_region
      %23 = dma.done [#allocation3], 256
    $region13: #{tpu_custom_call.1} parent=1 // pred_fallthru
      _
    %v24 = vld [vmem:[#allocation2] sm:$0xff]
    %v25 = vld [vmem:[#allocation2 + $0x8] sm:$0xff]
    %v26 = vld [vmem:[%s0] sm:$0xff]
    %28 = vset.pattern.permute.xlu0 0
    %29 = vperm.xlu0 %28, %v26
    %v30 = vpop.permute.xlu0 %29
    %v32 = vmul.f32 %v24, %v30
    %v33 = vmul.f32 %v25, %v30
    %34 = vst [vmem:[#allocation5] sm:$0xff] %v32
    %35 = vst [vmem:[#allocation5 + $0x8] sm:$0xff] %v33
    // Predicated region
    $region14: #{tpu_custom_call.1} parent=1 // pred_check
      _
    $region15: #{tpu_custom_call.1} parent=1 // pred_check_branch
      %37 = sbr.rel (0) target = $region17
    $region16: #{tpu_custom_call.1} parent=1 // pred_region
      %s39 = ssub.s32 256, 256
      %40 = vsyncadd [#allocation4], %s39
      %s42 = sshll.u32 [#allocation5], 4
      %s43 = int_to_ptr.vmem [resolvable:$true] %s42
      %45 = dma.vmem_to_hbm [thread:$0]  %s43, 256, %s2, [#allocation4]
    $region17: #{tpu_custom_call.1} parent=1 // pred_fallthru
      _
    // Predicated region
    $region18: #{tpu_custom_call.1} parent=1 // pred_check
      _
    $region19: #{tpu_custom_call.1} parent=1 // pred_check_branch
      %47 = sbr.rel (0) target = $region21
    $region20: #{tpu_custom_call.1} parent=1 // pred_region
      %48 = dma.done [#allocation4], 256
    $region21: #{tpu_custom_call.1} parent=1 // pred_fallthru
      _
    %49 = vsyncpa [#allocation3], 1
    %50 = vsyncpa [#allocation4], 1

</llo_original>
